<compile_context>
chip_gen: v7x
topology: tpu7x:2x2x1
jax: 0.10.0
libtpu: 0.0.40
codegen_flags: <defaults>
</compile_context>

<pallas_src>
import jax
import jax.numpy as jnp
from jax.experimental import pallas as pl
from jax.experimental.pallas import tpu as pltpu

# Spike threshold of the HeavisideBoxcarCall surrogate (forward = hard step).
# TODO(synk): verify `>=` vs `>` at exactly u == V_TH against the original
# surrogate implementation; behaviour differs only on that measure-zero set.
V_TH = 1.0

# Lane-dense slab tiling: last dim a large multiple of 128 -> unmasked vst.
_LANES = 1024          # slab width
_MAX_ROW_TILE = 512    # 512 * 1024 * 4 B = 2 MiB f32 blocks (x5 arrays x2 bufs = 20 MiB)


def _lif_kernel(decay_ref, u_ref, s_ref, i_ref, u_out_ref, spk_out_ref):
    u = u_ref[...]
    # decay is a scalar-prefetch (SMEM) f32; cast once per block to input dtype.
    decay = decay_ref[0].astype(u.dtype)
    s = s_ref[...].astype(u.dtype)     # S_before may be 0.5 (module init), keep exact formula
    i = i_ref[...].astype(u.dtype)
    u_new = decay * u * (1.0 - s) + i
    u_out_ref[...] = u_new.astype(u_out_ref.dtype)
    spk_out_ref[...] = (u_new >= V_TH).astype(spk_out_ref.dtype)


def lif_node(lif_u, s_before, i_in, lif_tau, spike_dtype=None):
    """Forward pass of LIF_Node.

    Args:
      lif_u:     membrane potential, float array.
      s_before:  previous spike map (may be non-binary, e.g. the 0.5 init).
      i_in:      input current, same shape as lif_u.
      lif_tau:   scalar tau (decay = sigmoid(tau)).
      spike_dtype: optional dtype for the spike output (e.g. jnp.int8 to cut
                   HBM traffic). Defaults to lif_u.dtype (module semantics).

    Returns (LIF_U_new, LIF_S) with LIF_U_new in lif_u.dtype.
    """
    assert lif_u.shape == s_before.shape == i_in.shape
    orig_shape = lif_u.shape
    dtype = lif_u.dtype
    spike_dtype = dtype if spike_dtype is None else spike_dtype
    total = lif_u.size

    # ---- lane-dense slab: (rows, _LANES). Pad only if strictly necessary. ----
    cols = _LANES
    pad = (-total) % cols
    rows = (total + pad) // cols

    def to_slab(x):
        flat = x.reshape(-1)
        if pad:
            flat = jnp.pad(flat, (0, pad))
        return flat.reshape(rows, cols)

    u2 = to_slab(lif_u)
    s2 = to_slab(s_before)
    i2 = to_slab(i_in)

    # Row tile: full extent if small (block == full dim is always legal),
    # otherwise a 512-row (8-multiple) tile; last block may overhang the grid.
    row_tile = rows if rows <= _MAX_ROW_TILE else _MAX_ROW_TILE
    grid = (pl.cdiv(rows, row_tile),)

    # decay as a runtime SMEM scalar -> no recompile when tau changes.
    decay = jax.nn.sigmoid(jnp.asarray(lif_tau, jnp.float32)).reshape(1)

    spec = pl.BlockSpec((row_tile, cols), lambda r, decay_ref: (r, 0))

    u_out, spk_out = pl.pallas_call(
        _lif_kernel,
        out_shape=(
            jax.ShapeDtypeStruct((rows, cols), dtype),
            jax.ShapeDtypeStruct((rows, cols), spike_dtype),
        ),
        grid_spec=pltpu.PrefetchScalarGridSpec(
            num_scalar_prefetch=1,
            grid=grid,
            in_specs=[spec, spec, spec],
            out_specs=(spec, spec),
        ),
        compiler_params=pltpu.CompilerParams(
            dimension_semantics=("parallel",),
            vmem_limit_bytes=32 << 20,
        ),
    )(decay, u2, s2, i2)

    if pad:
        u_out = u_out.reshape(-1)[:total]
        spk_out = spk_out.reshape(-1)[:total]
    return u_out.reshape(orig_shape), spk_out.reshape(orig_shape)


def _reference(lif_u, s_before, i_in, lif_tau):
    decay = jax.nn.sigmoid(jnp.asarray(lif_tau, jnp.float32)).astype(lif_u.dtype)
    u_new = decay * lif_u * (1.0 - s_before.astype(lif_u.dtype)) + i_in.astype(lif_u.dtype)
    spk = (u_new >= V_TH).astype(lif_u.dtype)
    return u_new, spk


if __name__ == "__main__":
    key = jax.random.PRNGKey(0)
    k1, k2 = jax.random.split(key, 2)

    B, C, H, W = 2, 4, 16, 16
    lif_tau = 1.0  # EMS_YOLO init_LIF_tau

    # --- case 1: module-style usage (membrane and spike initialized to 0.5) ---
    lif_u = jnp.full((B, C, H, W), 0.5, dtype=jnp.float32)
    s_before = jnp.full((B, C, H, W), 0.5, dtype=jnp.float32)
    i_in = jax.random.normal(k1, (B, C, H, W), dtype=jnp.float32)

    u_new, spk = lif_node(lif_u, s_before, i_in, lif_tau)
    jax.block_until_ready((u_new, spk))
    u_ref, spk_ref = _reference(lif_u, s_before, i_in, lif_tau)
    assert u_new.shape == u_ref.shape and spk.shape == spk_ref.shape
    assert u_new.dtype == lif_u.dtype
    assert jnp.allclose(u_new, u_ref, atol=1e-6, rtol=1e-6)
    assert jnp.array_equal(spk, spk_ref)

    # --- case 2: later-timestep usage (binary spike map), same kernel ---
    k3, k4, k5 = jax.random.split(k2, 3)
    lif_u2 = jax.random.normal(k3, (B, C, H, W), dtype=jnp.float32)
    s_bin = (jax.random.uniform(k4, (B, C, H, W)) > 0.5).astype(jnp.float32)
    i_in2 = jax.random.normal(k5, (B, C, H, W), dtype=jnp.float32)

    u_new2, spk2 = lif_node(lif_u2, s_bin, i_in2, lif_tau)
    jax.block_until_ready((u_new2, spk2))
    u_ref2, spk_ref2 = _reference(lif_u2, s_bin, i_in2, lif_tau)
    assert jnp.allclose(u_new2, u_ref2, atol=1e-6, rtol=1e-6)
    assert jnp.array_equal(spk2, spk_ref2)

    print("KERNEL_OK")
</pallas_src>

<mosaic_0001>
module attributes {stable_mosaic.version = 11 : i64} {
  func.func @_lif_kernel(%arg0: i32, %arg1: memref<1xf32, #tpu.memory_space<smem>>, %arg2: memref<2x1024xf32, #tpu.memory_space<vmem>>, %arg3: memref<2x1024xf32, #tpu.memory_space<vmem>>, %arg4: memref<2x1024xf32, #tpu.memory_space<vmem>>, %arg5: memref<2x1024xf32, #tpu.memory_space<vmem>>, %arg6: memref<2x1024xf32, #tpu.memory_space<vmem>>) attributes {dimension_semantics = [#tpu.dimension_semantics<parallel>], iteration_bounds = array<i64: 1>, scalar_prefetch = 1 : i64, scratch_operands = 0 : i64, tpu.core_type = #tpu.core_type<tc>, window_params = [{transform_indices = @transform_0, window_bounds = array<i64: 2, 1024>}, {transform_indices = @transform_1, window_bounds = array<i64: 2, 1024>}, {transform_indices = @transform_2, window_bounds = array<i64: 2, 1024>}, {transform_indices = @transform_3, window_bounds = array<i64: 2, 1024>}, {transform_indices = @transform_4, window_bounds = array<i64: 2, 1024>}]} {
    %c0 = arith.constant 0 : index
    %c0_0 = arith.constant 0 : index
    %0 = vector.load %arg2[%c0, %c0_0] : memref<2x1024xf32, #tpu.memory_space<vmem>>, vector<2x1024xf32>
    %c0_1 = arith.constant 0 : index
    %1 = memref.load %arg1[%c0_1] : memref<1xf32, #tpu.memory_space<smem>>
    %c0_2 = arith.constant 0 : index
    %c0_3 = arith.constant 0 : index
    %2 = vector.load %arg3[%c0_2, %c0_3] : memref<2x1024xf32, #tpu.memory_space<vmem>>, vector<2x1024xf32>
    %c0_4 = arith.constant 0 : index
    %c0_5 = arith.constant 0 : index
    %3 = vector.load %arg4[%c0_4, %c0_5] : memref<2x1024xf32, #tpu.memory_space<vmem>>, vector<2x1024xf32>
    %4 = vector.broadcast %1 : f32 to vector<2x1024xf32>
    %5 = arith.mulf %4, %0 : vector<2x1024xf32>
    %cst = arith.constant 1.000000e+00 : f32
    %6 = vector.broadcast %cst : f32 to vector<2x1024xf32>
    %7 = arith.subf %6, %2 : vector<2x1024xf32>
    %8 = arith.mulf %5, %7 : vector<2x1024xf32>
    %9 = arith.addf %8, %3 : vector<2x1024xf32>
    %c0_6 = arith.constant 0 : index
    %c0_7 = arith.constant 0 : index
    %10 = vector.load %arg5[%c0_6, %c0_7] : memref<2x1024xf32, #tpu.memory_space<vmem>>, vector<2x1024xf32>
    tpu.vector_store %arg5[%c0_6, %c0_7], %9 {strides = array<i32>} : memref<2x1024xf32, #tpu.memory_space<vmem>>, vector<2x1024xf32>,
    %cst_8 = arith.constant 1.000000e+00 : f32
    %11 = vector.broadcast %cst_8 : f32 to vector<2x1024xf32>
    %12 = arith.cmpf oge, %9, %11 : vector<2x1024xf32>
    %13 = arith.extui %12 : vector<2x1024xi1> to vector<2x1024xi32>
    %14 = arith.sitofp %13 : vector<2x1024xi32> to vector<2x1024xf32>
    %c0_9 = arith.constant 0 : index
    %c0_10 = arith.constant 0 : index
    %15 = vector.load %arg6[%c0_9, %c0_10] : memref<2x1024xf32, #tpu.memory_space<vmem>>, vector<2x1024xf32>
    tpu.vector_store %arg6[%c0_9, %c0_10], %14 {strides = array<i32>} : memref<2x1024xf32, #tpu.memory_space<vmem>>, vector<2x1024xf32>,
    return
  }
  func.func @transform_0(%arg0: i32, %arg1: memref<1xf32, #tpu.memory_space<smem>>) -> (i32, i32) {
    %c0_i32 = arith.constant 0 : i32
    %c0_i32_0 = arith.constant 0 : i32
    return %arg0, %c0_i32 : i32, i32
  }
  func.func @transform_1(%arg0: i32, %arg1: memref<1xf32, #tpu.memory_space<smem>>) -> (i32, i32) {
    %c0_i32 = arith.constant 0 : i32
    %c0_i32_0 = arith.constant 0 : i32
    return %arg0, %c0_i32 : i32, i32
  }
  func.func @transform_2(%arg0: i32, %arg1: memref<1xf32, #tpu.memory_space<smem>>) -> (i32, i32) {
    %c0_i32 = arith.constant 0 : i32
    %c0_i32_0 = arith.constant 0 : i32
    return %arg0, %c0_i32 : i32, i32
  }
  func.func @transform_3(%arg0: i32, %arg1: memref<1xf32, #tpu.memory_space<smem>>) -> (i32, i32) {
    %c0_i32 = arith.constant 0 : i32
    %c0_i32_0 = arith.constant 0 : i32
    return %arg0, %c0_i32 : i32, i32
  }
  func.func @transform_4(%arg0: i32, %arg1: memref<1xf32, #tpu.memory_space<smem>>) -> (i32, i32) {
    %c0_i32 = arith.constant 0 : i32
    %c0_i32_0 = arith.constant 0 : i32
    return %arg0, %c0_i32 : i32, i32
  }
}

</mosaic_0001>

<llo_original>
// kernel: tpu_custom_call.1
$region0: #{tpu_custom_call.1}
  #allocation0 [shape = 'u32[]', space=smem, size = 0x4, offset = 0x4, fixed_abs, tag = 'smem constant byte address 0x4 - core index']
  #allocation1 [shape = 'u32[144,128]{1,0:T(1,128)}', space=vmem, size = 0x12000, scoped, tag = 'internal scratch']
  #allocation2 [shape = 's32[1]{0}', space=sflag, size = 0x4, scoped, tag = 'scoped memory for tpu_custom_call.1']
  #allocation3 [shape = 'f32[1]{0:T(128)S(6)}', space=smem, size = 0x200, scoped, tag = 'prefetched SMEM operand 0']
  %s0 = inlined_call_operand.<no memory space> [shape: f32[1], index: 0, kind: input, shape index: {}]
  %s1 = inlined_call_operand.hbm [shape: f32[2,1024], index: 1, kind: input, shape index: {}]
  %s2 = inlined_call_operand.hbm [shape: f32[2,1024], index: 2, kind: input, shape index: {}]
  %s3 = inlined_call_operand.hbm [shape: f32[2,1024], index: 3, kind: input, shape index: {}]
  %s4 = inlined_call_operand.hbm [shape: f32[2,1024], index: 4, kind: output, shape index: {0}]
  %s5 = inlined_call_operand.hbm [shape: f32[2,1024], index: 5, kind: output, shape index: {1}]
  %6 = xla_tuple %s4, %s5
  %s7 = sld [smem:[#allocation0]]
  $region42: #{tpu_custom_call.1} parent=0
    _
  %s9 = ssub.s32 1, %s7
  %s10 = scalar_select 0, %s9, %s7
  %11 = sst [smem:[#allocation3]] %s0
  $region1: #{tpu_custom_call.1} parent=0
    #allocation4 [shape = 'u8[8192]{0}', space=vmem, size = 0x2000, scoped, tag = 'input window, operand 1, single buffered']
    #allocation5 [shape = 's32[1]{0}', space=sflag, size = 0x4, scoped, tag = 'scoped memory for tpu_custom_call.1']
    #allocation6 [shape = 's32[1]{0}', space=sflag, size = 0x4, scoped, tag = 'scoped memory for tpu_custom_call.1']
    #allocation7 [shape = 'u8[8192]{0}', space=vmem, size = 0x2000, scoped, tag = 'input window, operand 2, single buffered']
    #allocation8 [shape = 's32[1]{0}', space=sflag, size = 0x4, scoped, tag = 'scoped memory for tpu_custom_call.1']
    #allocation9 [shape = 'u8[8192]{0}', space=vmem, size = 0x2000, scoped, tag = 'input window, operand 3, single buffered']
    #allocation10 [shape = 'u8[8192]{0}', space=vmem, size = 0x2000, scoped, tag = 'output window, operand 0, single buffered']
    #allocation11 [shape = 'u8[8192]{0}', space=vmem, size = 0x2000, scoped, tag = 'output window, operand 1, single buffered']
    #allocation12 [shape = 's32[1]{0}', space=sflag, size = 0x4, scoped, tag = 'scoped memory for tpu_custom_call.1']
    %12 = vsyncpa [#allocation5], 0
    %13 = vsyncpa [#allocation8], 0
    %14 = vsyncpa [#allocation6], 0
    %15 = vsyncpa [#allocation12], 0
    // Predicated region
    $region2: #{tpu_custom_call.1} parent=1 // pred_check
      _
    $region3: #{tpu_custom_call.1} parent=1 // pred_check_branch
      %17 = sbr.rel (0) target = $region5
    $region4: #{tpu_custom_call.1} parent=1 // pred_region
      %s19 = ssub.s32 256, 256
      %20 = vsyncadd [#allocation5], %s19
      %s22 = sshll.u32 [#allocation4], 4
      %s23 = int_to_ptr.vmem [resolvable:$true] %s22
      %25 = dma.hbm_to_vmem [thread:$0]  %s1, 256, %s23, [#allocation5]
    $region5: #{tpu_custom_call.1} parent=1 // pred_fallthru
      _
    // Predicated region
    $region6: #{tpu_custom_call.1} parent=1 // pred_check
      _
    $region7: #{tpu_custom_call.1} parent=1 // pred_check_branch
      %27 = sbr.rel (0) target = $region9
    $region8: #{tpu_custom_call.1} parent=1 // pred_region
      %s29 = ssub.s32 256, 256
      %30 = vsyncadd [#allocation8], %s29
      %s32 = sshll.u32 [#allocation7], 4
      %s33 = int_to_ptr.vmem [resolvable:$true] %s32
      %35 = dma.hbm_to_vmem [thread:$0]  %s2, 256, %s33, [#allocation8]
    $region9: #{tpu_custom_call.1} parent=1 // pred_fallthru
      _
    // Predicated region
    $region10: #{tpu_custom_call.1} parent=1 // pred_check
      _
    $region11: #{tpu_custom_call.1} parent=1 // pred_check_branch
      %37 = sbr.rel (0) target = $region13
    $region12: #{tpu_custom_call.1} parent=1 // pred_region
      %s39 = ssub.s32 256, 256
      %40 = vsyncadd [#allocation8], %s39
      %s42 = sshll.u32 [#allocation9], 4
      %s43 = int_to_ptr.vmem [resolvable:$true] %s42
      %45 = dma.hbm_to_vmem [thread:$0]  %s3, 256, %s43, [#allocation8]
    $region13: #{tpu_custom_call.1} parent=1 // pred_fallthru
      _
    // Predicated region
    $region14: #{tpu_custom_call.1} parent=1 // pred_check
      _
    $region15: #{tpu_custom_call.1} parent=1 // pred_check_branch
      %47 = sbr.rel (0) target = $region17
    $region16: #{tpu_custom_call.1} parent=1 // pred_region
      %48 = dma.done [#allocation5], 256
    $region17: #{tpu_custom_call.1} parent=1 // pred_fallthru
      _
    // Predicated region
    $region18: #{tpu_custom_call.1} parent=1 // pred_check
      _
    $region19: #{tpu_custom_call.1} parent=1 // pred_check_branch
      %50 = sbr.rel (0) target = $region21
    $region20: #{tpu_custom_call.1} parent=1 // pred_region
      %51 = dma.done [#allocation8], 256
    $region21: #{tpu_custom_call.1} parent=1 // pred_fallthru
      _
    // Predicated region
    $region22: #{tpu_custom_call.1} parent=1 // pred_check
      _
    $region23: #{tpu_custom_call.1} parent=1 // pred_check_branch
      %53 = sbr.rel (0) target = $region25
    $region24: #{tpu_custom_call.1} parent=1 // pred_region
      %54 = dma.done [#allocation8], 256
    $region25: #{tpu_custom_call.1} parent=1 // pred_fallthru
      _
    %v55 = vld [vmem:[#allocation4] sm:$0xff]
    %v56 = vld [vmem:[#allocation4 + $0x8] sm:$0xff]
    %s57 = sld [smem:[#allocation3]]
    %v58 = vld [vmem:[#allocation7] sm:$0xff]
    %v59 = vld [vmem:[#allocation7 + $0x8] sm:$0xff]
    %v60 = vld [vmem:[#allocation9] sm:$0xff]
    %v61 = vld [vmem:[#allocation9 + $0x8] sm:$0xff]
    %v62 = vstv %s57
    %v63 = vmul.f32 %v62, %v55
    %v64 = vmul.f32 %v62, %v56
    %v65 = vsub.f32 1.0, %v58
    %v66 = vsub.f32 1.0, %v59
    %v67 = vmul.f32 %v63, %v65
    %v68 = vmul.f32 %v64, %v66
    %v69 = vadd.f32 %v67, %v60
    %v70 = vadd.f32 %v68, %v61
    %71 = vst [vmem:[#allocation10] sm:$0xff] %v69
    %72 = vst [vmem:[#allocation10 + $0x8] sm:$0xff] %v70
    %vm73 = vcmp.ge.f32.partialorder %v69, 1.0
    %vm74 = vcmp.ge.f32.partialorder %v70, 1.0
    %v75 = vsel %vm73, 1, 0
    %v76 = vsel %vm74, 1, 0
    %v77 = vcvt.s32.f32 %v75
    %v78 = vcvt.s32.f32 %v76
    %79 = vst [vmem:[#allocation11] sm:$0xff] %v77
    %80 = vst [vmem:[#allocation11 + $0x8] sm:$0xff] %v78
    // Predicated region
    $region26: #{tpu_custom_call.1} parent=1 // pred_check
      _
    $region27: #{tpu_custom_call.1} parent=1 // pred_check_branch
      %82 = sbr.rel (0) target = $region29
    $region28: #{tpu_custom_call.1} parent=1 // pred_region
      %s84 = ssub.s32 256, 256
      %85 = vsyncadd [#allocation6], %s84
      %s87 = sshll.u32 [#allocation10], 4
      %s88 = int_to_ptr.vmem [resolvable:$true] %s87
      %90 = dma.vmem_to_hbm [thread:$0]  %s88, 256, %s4, [#allocation6]
    $region29: #{tpu_custom_call.1} parent=1 // pred_fallthru
      _
    // Predicated region
    $region30: #{tpu_custom_call.1} parent=1 // pred_check
      _
    $region31: #{tpu_custom_call.1} parent=1 // pred_check_branch
      %92 = sbr.rel (0) target = $region33
    $region32: #{tpu_custom_call.1} parent=1 // pred_region
      %s94 = ssub.s32 256, 256
      %95 = vsyncadd [#allocation12], %s94
      %s97 = sshll.u32 [#allocation11], 4
      %s98 = int_to_ptr.vmem [resolvable:$true] %s97
      %100 = dma.vmem_to_hbm [thread:$0]  %s98, 256, %s5, [#allocation12]
    $region33: #{tpu_custom_call.1} parent=1 // pred_fallthru
      _
    // Predicated region
    $region34: #{tpu_custom_call.1} parent=1 // pred_check
      _
    $region35: #{tpu_custom_call.1} parent=1 // pred_check_branch
      %102 = sbr.rel (0) target = $region37
    $region36: #{tpu_custom_call.1} parent=1 // pred_region
      %103 = dma.done [#allocation6], 256
    $region37: #{tpu_custom_call.1} parent=1 // pred_fallthru
      _
    // Predicated region
    $region38: #{tpu_custom_call.1} parent=1 // pred_check
      _
    $region39: #{tpu_custom_call.1} parent=1 // pred_check_branch
      %105 = sbr.rel (0) target = $region41
    $region40: #{tpu_custom_call.1} parent=1 // pred_region
      %106 = dma.done [#allocation12], 256
    $region41: #{tpu_custom_call.1} parent=1 // pred_fallthru
      _
    %107 = vsyncpa [#allocation5], 1
    %108 = vsyncpa [#allocation8], 1
    %109 = vsyncpa [#allocation6], 1
    %110 = vsyncpa [#allocation12], 1

</llo_original>
